<compile_context>
chip_gen: v7x
topology: tpu7x:2x2x1
jax: 0.10.0
libtpu: 0.0.40
codegen_flags: <defaults>
</compile_context>

<pallas_src>
from functools import partial
from typing import NamedTuple

import jax
import jax.numpy as jnp
from jax import lax
from jax.experimental import pallas as pl
from jax.experimental.pallas import tpu as pltpu


# ----------------------------------------------------------------------------
# Small helpers
# ----------------------------------------------------------------------------
def _round_up(n: int, m: int) -> int:
    return ((n + m - 1) // m) * m


def _pick_time_block(T: int) -> int:
    """Largest convenient divisor of T in [1, 32] so grid=(T//Tb,) is exact."""
    for tb in (32, 16, 8, 4, 2, 1):
        if T % tb == 0:
            return tb
    return 1


def _resident_spec(block_shape, index_map):
    """Constant-index (weight-resident) BlockSpec.

    Single-buffered: default double-buffering of a block whose index never
    changes just wastes VMEM (critical on v7x's 64 MiB per-core VMEM).
    """
    try:
        return pl.BlockSpec(block_shape, index_map, pipeline_mode=pl.Buffered(1))
    except TypeError:  # older JAX without pipeline_mode kwarg
        return pl.BlockSpec(block_shape, index_map)


def _maybe_vmem_limit(approx_bytes: int):
    """Raise the scoped-VMEM limit only when resident weights + pipeline
    buffers approach the 32 MiB default; keep headroom under physical VMEM.
    """
    # TODO(synk): for Hp >= ~4K f32 on v7x, tile the K axis of W_rec instead of
    # relying on a bigger scoped limit.
    needed = int(approx_bytes * 1.5) + (4 << 20)
    if needed <= (32 << 20):
        return None
    return min(needed, 96 << 20)


# ----------------------------------------------------------------------------
# Parameter preparation (one-time: transpose, fuse bias, zero-pad)
# ----------------------------------------------------------------------------
class RNNDims(NamedTuple):
    d_in: int
    H: int
    O: int
    Dp: int   # padded D_in
    Hp: int   # padded H
    Op: int   # padded O


class RNNParams(NamedTuple):
    wi: jnp.ndarray   # [Dp, Hp]  W_in^T   (zero-padded)
    wr: jnp.ndarray   # [Hp, Hp]  W_rec^T  (zero-padded)
    b1: jnp.ndarray   # [1, Hp]   b_in + b_rec
    w2: jnp.ndarray   # [Hp, Op]  W_out^T
    b2: jnp.ndarray   # [1, Op]


def prepare_params(w_in, b_in, w_rec, b_rec, w_out, b_out,
                   *, use_bf16_weights: bool = False, lane_multiple: int = 128):
    """PyTorch nn.Linear layout in ([out_features, in_features]).

    lane_multiple: 128 is always legal; use 256 for large H on v6e/v7x so the
    2x256^2 MXU sees full-width final tiles (keep 128 on v5e).
    use_bf16_weights: halves resident weight VMEM and uses the bf16 MXU path;
    activations and accumulation stay f32 (safe on v5e's f32-only VPU).
    """
    H, d_in = w_in.shape
    assert w_rec.shape == (H, H)
    O = w_out.shape[0]
    Dp = _round_up(d_in, lane_multiple)
    Hp = _round_up(H, lane_multiple)
    Op = _round_up(O, lane_multiple)
    wdt = jnp.bfloat16 if use_bf16_weights else jnp.float32

    wi = jnp.pad(w_in.T, ((0, Dp - d_in), (0, Hp - H))).astype(wdt)
    wr = jnp.pad(w_rec.T, ((0, Hp - H), (0, Hp - H))).astype(wdt)
    b1 = jnp.pad((b_in + b_rec).reshape(1, H), ((0, 0), (0, Hp - H))).astype(jnp.float32)
    w2 = jnp.pad(w_out.T, ((0, Hp - H), (0, Op - O))).astype(wdt)
    b2 = jnp.pad(b_out.reshape(1, O), ((0, 0), (0, Op - O))).astype(jnp.float32)

    return (RNNParams(wi, wr, b1, w2, b2),
            RNNDims(d_in=d_in, H=H, O=O, Dp=Dp, Hp=Hp, Op=Op))


# ----------------------------------------------------------------------------
# Kernels
# ----------------------------------------------------------------------------
def _proj_kernel(x_ref, w_ref, b_ref, o_ref, *, apply_relu):
    """o = [ReLU](x @ w + b) on one M-tile; w/b are resident (constant index)."""
    acc = jnp.dot(x_ref[...].astype(w_ref.dtype), w_ref[...],
                  preferred_element_type=jnp.float32) + b_ref[...]
    if apply_relu:
        acc = jnp.maximum(acc, 0.0)
    o_ref[...] = acc


def _recurrent_kernel(p_ref, h0_ref, wr_ref, s_seq_ref, hT_ref, h_scr, *, tb):
    """Serial recurrence over one time-chunk of Tb steps.

    p_ref     : [Tb, B, Hp]  precomputed x-projection + fused bias
    h0_ref    : [B, Hp]      initial hidden state (used only at chunk 0)
    wr_ref    : [Hp, Hp]     W_rec^T, resident in VMEM across the whole grid
    s_seq_ref : [Tb, B, Hp]  hidden states emitted for the output projection
    hT_ref    : [B, Hp]      final hidden state (written on the last chunk)
    h_scr     : [B, Hp]      VMEM scratch carrying h across grid steps
    """
    c = pl.program_id(0)

    @pl.when(c == 0)
    def _():
        h_scr[...] = h0_ref[...]

    def step(i, h):
        s = jnp.maximum(
            jnp.dot(h.astype(wr_ref.dtype), wr_ref[...],
                    preferred_element_type=jnp.float32) + p_ref[i],
            0.0)
        s_seq_ref[i] = s
        return s

    h = lax.fori_loop(0, tb, step, h_scr[...], unroll=True)
    h_scr[...] = h

    @pl.when(c == pl.num_programs(0) - 1)
    def _():
        hT_ref[...] = h


def _step_kernel(x_ref, h_ref, wi_ref, wr_ref, b1_ref, w2_ref, b2_ref,
                 out_ref, hN_ref):
    """Single RNN step on padded, lane-dense operands (x and h separate refs)."""
    s = jnp.maximum(
        jnp.dot(x_ref[...].astype(wi_ref.dtype), wi_ref[...],
                preferred_element_type=jnp.float32)
        + jnp.dot(h_ref[...].astype(wr_ref.dtype), wr_ref[...],
                  preferred_element_type=jnp.float32)
        + b1_ref[...],
        0.0)
    o = jnp.dot(s.astype(w2_ref.dtype), w2_ref[...],
                preferred_element_type=jnp.float32) + b2_ref[...]
    out_ref[...] = jnp.maximum(o, 0.0)
    hN_ref[...] = s


# ----------------------------------------------------------------------------
# Wrappers
# ----------------------------------------------------------------------------
def _project(x2d, w, b, apply_relu, *, m_tile=256):
    """Big M-row projection: [M, Kp] @ [Kp, Np] + b, optional ReLU."""
    M, Kp = x2d.shape
    Np = w.shape[1]
    Mt = min(m_tile, M)                 # multiple of 8 because B is
    Mp = _round_up(M, Mt)
    if Mp != M:
        x2d = jnp.pad(x2d, ((0, Mp - M), (0, 0)))
    resident = (Kp * Np + Np) * w.dtype.itemsize
    buffers = 4 * Mt * (Kp + Np) * 4    # double-buffered x-in / o-out tiles
    out = pl.pallas_call(
        partial(_proj_kernel, apply_relu=apply_relu),
        grid=(Mp // Mt,),
        in_specs=[
            pl.BlockSpec((Mt, Kp), lambda m: (m, 0)),
            _resident_spec((Kp, Np), lambda m: (0, 0)),
            _resident_spec((1, Np), lambda m: (0, 0)),
        ],
        out_specs=pl.BlockSpec((Mt, Np), lambda m: (m, 0)),
        out_shape=jax.ShapeDtypeStruct((Mp, Np), jnp.float32),
        compiler_params=pltpu.CompilerParams(
            dimension_semantics=("parallel",),
            vmem_limit_bytes=_maybe_vmem_limit(resident + buffers),
        ),
    )(x2d, w, b)
    return out if Mp == M else out[:M]


@partial(jax.jit, static_argnames=("dims",))
def vanilla_rnn_forward_seq(x_seq, state0, params: RNNParams, dims: RNNDims):
    """Whole sequence: x_seq [T, B, D_in], state0 [B, H]
    -> (out_seq [T, B, O], state_T [B, H])."""
    T, B, _ = x_seq.shape
    assert B % 8 == 0, "batch should be a multiple of 8 (f32 sublane) for dense stores"
    M = T * B

    # 1) Hoisted input projection over all T*B rows; fused bias folded in here,
    #    so the serial loop below has no bias add / broadcast at all.
    x2d = jnp.pad(x_seq.reshape(M, dims.d_in), ((0, 0), (0, dims.Dp - dims.d_in)))
    P = _project(x2d, params.wi, params.b1, apply_relu=False).reshape(T, B, dims.Hp)

    # 2) Serial recurrence: time grid chunked by Tb, W_rec^T resident in VMEM,
    #    hidden state carried in a VMEM scratch accumulator.
    h0_p = jnp.pad(state0, ((0, 0), (0, dims.Hp - dims.H)))
    Tb = _pick_time_block(T)
    resident = params.wr.size * params.wr.dtype.itemsize
    buffers = 4 * Tb * B * dims.Hp * 4 + 2 * B * dims.Hp * 4
    s_seq, hT = pl.pallas_call(
        partial(_recurrent_kernel, tb=Tb),
        grid=(T // Tb,),
        in_specs=[
            pl.BlockSpec((Tb, B, dims.Hp), lambda c: (c, 0, 0)),    # P chunk
            pl.BlockSpec((B, dims.Hp), lambda c: (0, 0)),           # h0
            _resident_spec((dims.Hp, dims.Hp), lambda c: (0, 0)),   # W_rec^T
        ],
        out_specs=(
            pl.BlockSpec((Tb, B, dims.Hp), lambda c: (c, 0, 0)),    # hidden states
            pl.BlockSpec((B, dims.Hp), lambda c: (0, 0)),           # final state
        ),
        out_shape=(
            jax.ShapeDtypeStruct((T, B, dims.Hp), jnp.float32),
            jax.ShapeDtypeStruct((B, dims.Hp), jnp.float32),
        ),
        scratch_shapes=[pltpu.VMEM((B, dims.Hp), jnp.float32)],
        compiler_params=pltpu.CompilerParams(
            dimension_semantics=("arbitrary",),
            vmem_limit_bytes=_maybe_vmem_limit(resident + buffers),
        ),
    )(P, h0_p, params.wr)
    # TODO(synk): on v7x add a leading "parallel" batch-tile grid axis so the
    # two TensorCores each carry half the batch through the recurrence.

    # 3) Hoisted output projection over all T*B hidden states.
    out2d = _project(s_seq.reshape(M, dims.Hp), params.w2, params.b2, apply_relu=True)
    out_seq = out2d.reshape(T, B, dims.Op)[:, :, :dims.O]
    return out_seq, hT[:, :dims.H]


@partial(jax.jit, static_argnames=("dims",))
def vanilla_rnn_step_padded(x_p, h_p, params: RNNParams, dims: RNNDims):
    """Fast per-step path: x_p [B, Dp] and h_p [B, Hp] are already padded;
    returns padded (out_p [B, Op], h_new_p [B, Hp]) so the recurrent state can
    be fed back across calls without per-call pad/concat/slice round trips."""
    B = x_p.shape[0]
    vmem = pl.BlockSpec(memory_space=pltpu.MemorySpace.VMEM)
    return pl.pallas_call(
        _step_kernel,
        in_specs=[vmem] * 7,
        out_specs=(vmem, vmem),
        out_shape=(
            jax.ShapeDtypeStruct((B, dims.Op), jnp.float32),
            jax.ShapeDtypeStruct((B, dims.Hp), jnp.float32),
        ),
    )(x_p, h_p, params.wi, params.wr, params.b1, params.w2, params.b2)


def pad_input(x, dims: RNNDims):
    return jnp.pad(x, ((0, 0), (0, dims.Dp - dims.d_in)))


def pad_state(h, dims: RNNDims):
    return jnp.pad(h, ((0, 0), (0, dims.Hp - dims.H)))


def vanilla_rnn_forward(x, state, params: RNNParams, dims: RNNDims):
    """Module-faithful single step (unpadded in/out), matching
    VanillaRNN.forward(X, state) -> (out, state).  For tight step-by-step
    loops prefer vanilla_rnn_step_padded; for sequences use
    vanilla_rnn_forward_seq."""
    if state is None:
        state = jnp.zeros((x.shape[0], dims.H), dtype=jnp.float32)
    out_p, h_p = vanilla_rnn_step_padded(
        pad_input(x, dims), pad_state(state, dims), params, dims)
    return out_p[:, :dims.O], h_p[:, :dims.H]


# ----------------------------------------------------------------------------
# Parameter init matching VanillaRNN._init_weights (kaiming_normal_, bias N(0,0.1))
# ----------------------------------------------------------------------------
def init_params(key, input_dim, hidden_dim, output_dim):
    ks = jax.random.split(key, 6)

    def kaiming(k, out_f, in_f):
        std = jnp.sqrt(2.0 / in_f)
        return jax.random.normal(k, (out_f, in_f), dtype=jnp.float32) * std

    w_in = kaiming(ks[0], hidden_dim, input_dim)
    b_in = jax.random.normal(ks[1], (hidden_dim,), dtype=jnp.float32) * 0.1
    w_rec = kaiming(ks[2], hidden_dim, hidden_dim)
    b_rec = jax.random.normal(ks[3], (hidden_dim,), dtype=jnp.float32) * 0.1
    w_out = kaiming(ks[4], output_dim, hidden_dim)
    b_out = jax.random.normal(ks[5], (output_dim,), dtype=jnp.float32) * 0.1
    return w_in, b_in, w_rec, b_rec, w_out, b_out


if __name__ == "__main__":
    B, D_IN, HIDDEN, D_OUT, T = 8, 16, 32, 8, 8

    key = jax.random.PRNGKey(0)
    k_x, k_p, k_seq = jax.random.split(key, 3)

    raw = init_params(k_p, D_IN, HIDDEN, D_OUT)
    w_in, b_in, w_rec, b_rec, w_out, b_out = raw
    params, dims = prepare_params(*raw)

    hp = lambda a, b: jnp.dot(a, b, precision=jax.lax.Precision.HIGHEST)

    # --- single step (state=None -> zeros), matches VanillaRNN.forward ---
    x = jax.random.normal(k_x, (B, D_IN), dtype=jnp.float32)
    out, new_state = vanilla_rnn_forward(x, None, params, dims)
    out = jax.block_until_ready(out)
    new_state = jax.block_until_ready(new_state)

    state0 = jnp.zeros((B, HIDDEN), dtype=jnp.float32)
    s_ref = jnp.maximum(hp(x, w_in.T) + b_in + hp(state0, w_rec.T) + b_rec, 0.0)
    o_ref = jnp.maximum(hp(s_ref, w_out.T) + b_out, 0.0)
    assert jnp.allclose(out, o_ref, atol=1e-3, rtol=1e-3), "single-step output mismatch"
    assert jnp.allclose(new_state, s_ref, atol=1e-3, rtol=1e-3), "single-step state mismatch"

    # --- sequence path (hoisted projections + chunked recurrent kernel) ---
    x_seq = jax.random.normal(k_seq, (T, B, D_IN), dtype=jnp.float32)
    out_seq, state_T = vanilla_rnn_forward_seq(x_seq, state0, params, dims)
    out_seq = jax.block_until_ready(out_seq)
    state_T = jax.block_until_ready(state_T)

    def _step(h, xt):
        s = jnp.maximum(hp(xt, w_in.T) + b_in + hp(h, w_rec.T) + b_rec, 0.0)
        o = jnp.maximum(hp(s, w_out.T) + b_out, 0.0)
        return s, o

    h_final_ref, out_seq_ref = jax.lax.scan(_step, state0, x_seq)
    assert jnp.allclose(out_seq, out_seq_ref, atol=1e-3, rtol=1e-3), "sequence output mismatch"
    assert jnp.allclose(state_T, h_final_ref, atol=1e-3, rtol=1e-3), "sequence final-state mismatch"

    print("KERNEL_OK")
</pallas_src>

<mosaic_0001>
module attributes {stable_mosaic.version = 11 : i64} {
  func.func @_step_kernel(%arg0: memref<8x128xf32, #tpu.memory_space<vmem>>, %arg1: memref<8x128xf32, #tpu.memory_space<vmem>>, %arg2: memref<128x128xf32, #tpu.memory_space<vmem>>, %arg3: memref<128x128xf32, #tpu.memory_space<vmem>>, %arg4: memref<1x128xf32, #tpu.memory_space<vmem>>, %arg5: memref<128x128xf32, #tpu.memory_space<vmem>>, %arg6: memref<1x128xf32, #tpu.memory_space<vmem>>, %arg7: memref<8x128xf32, #tpu.memory_space<vmem>>, %arg8: memref<8x128xf32, #tpu.memory_space<vmem>>) attributes {dimension_semantics = [], scalar_prefetch = 0 : i64, scratch_operands = 0 : i64, tpu.core_type = #tpu.core_type<tc>} {
    %c0 = arith.constant 0 : index
    %c0_0 = arith.constant 0 : index
    %0 = vector.load %arg0[%c0, %c0_0] : memref<8x128xf32, #tpu.memory_space<vmem>>, vector<8x128xf32>
    %c0_1 = arith.constant 0 : index
    %c0_2 = arith.constant 0 : index
    %1 = vector.load %arg2[%c0_1, %c0_2] : memref<128x128xf32, #tpu.memory_space<vmem>>, vector<128x128xf32>
    %cst = arith.constant dense<0.000000e+00> : vector<8x128xf32>
    %2 = tpu.matmul %0, %1, %cst {dimension_numbers = #tpu.dot_dimension_numbers<[1], [0], [0], [1], [0, 0, 1, 1], [], []>} : vector<8x128xf32>, vector<128x128xf32>, vector<8x128xf32> -> vector<8x128xf32>
    %c0_3 = arith.constant 0 : index
    %c0_4 = arith.constant 0 : index
    %3 = vector.load %arg1[%c0_3, %c0_4] : memref<8x128xf32, #tpu.memory_space<vmem>>, vector<8x128xf32>
    %c0_5 = arith.constant 0 : index
    %c0_6 = arith.constant 0 : index
    %4 = vector.load %arg3[%c0_5, %c0_6] : memref<128x128xf32, #tpu.memory_space<vmem>>, vector<128x128xf32>
    %cst_7 = arith.constant dense<0.000000e+00> : vector<8x128xf32>
    %5 = tpu.matmul %3, %4, %cst_7 {dimension_numbers = #tpu.dot_dimension_numbers<[1], [0], [0], [1], [0, 0, 1, 1], [], []>} : vector<8x128xf32>, vector<128x128xf32>, vector<8x128xf32> -> vector<8x128xf32>
    %6 = arith.addf %2, %5 : vector<8x128xf32>
    %c0_8 = arith.constant 0 : index
    %c0_9 = arith.constant 0 : index
    %7 = vector.load %arg4[%c0_8, %c0_9] : memref<1x128xf32, #tpu.memory_space<vmem>>, vector<1x128xf32>
    %8 = vector.broadcast %7 : vector<1x128xf32> to vector<8x128xf32>
    %9 = arith.addf %6, %8 : vector<8x128xf32>
    %cst_10 = arith.constant 0.000000e+00 : f32
    %10 = vector.broadcast %cst_10 : f32 to vector<8x128xf32>
    %11 = arith.maximumf %9, %10 : vector<8x128xf32>
    %c0_11 = arith.constant 0 : index
    %c0_12 = arith.constant 0 : index
    %12 = vector.load %arg5[%c0_11, %c0_12] : memref<128x128xf32, #tpu.memory_space<vmem>>, vector<128x128xf32>
    %cst_13 = arith.constant dense<0.000000e+00> : vector<8x128xf32>
    %13 = tpu.matmul %11, %12, %cst_13 {dimension_numbers = #tpu.dot_dimension_numbers<[1], [0], [0], [1], [0, 0, 1, 1], [], []>} : vector<8x128xf32>, vector<128x128xf32>, vector<8x128xf32> -> vector<8x128xf32>
    %c0_14 = arith.constant 0 : index
    %c0_15 = arith.constant 0 : index
    %14 = vector.load %arg6[%c0_14, %c0_15] : memref<1x128xf32, #tpu.memory_space<vmem>>, vector<1x128xf32>
    %15 = vector.broadcast %14 : vector<1x128xf32> to vector<8x128xf32>
    %16 = arith.addf %13, %15 : vector<8x128xf32>
    %cst_16 = arith.constant 0.000000e+00 : f32
    %17 = vector.broadcast %cst_16 : f32 to vector<8x128xf32>
    %18 = arith.maximumf %16, %17 : vector<8x128xf32>
    %c0_17 = arith.constant 0 : index
    %c0_18 = arith.constant 0 : index
    %19 = vector.load %arg7[%c0_17, %c0_18] : memref<8x128xf32, #tpu.memory_space<vmem>>, vector<8x128xf32>
    tpu.vector_store %arg7[%c0_17, %c0_18], %18 {strides = array<i32>} : memref<8x128xf32, #tpu.memory_space<vmem>>, vector<8x128xf32>,
    %c0_19 = arith.constant 0 : index
    %c0_20 = arith.constant 0 : index
    %20 = vector.load %arg8[%c0_19, %c0_20] : memref<8x128xf32, #tpu.memory_space<vmem>>, vector<8x128xf32>
    tpu.vector_store %arg8[%c0_19, %c0_20], %11 {strides = array<i32>} : memref<8x128xf32, #tpu.memory_space<vmem>>, vector<8x128xf32>,
    return
  }
}

</mosaic_0001>

<llo_original>
// kernel: vanilla_rnn_step_padded.1
$region0: #{vanilla_rnn_step_padded.1}
  #allocation0 [shape = 'u32[]', space=smem, size = 0x4, offset = 0x4, fixed_abs, tag = 'smem constant byte address 0x4 - core index']
  #allocation1 [shape = 'u32[144,128]{1,0:T(1,128)}', space=vmem, size = 0x12000, scoped, tag = 'internal scratch']
  %s0 = inlined_call_operand.hbm [shape: f32[8,128], index: 0, kind: input, shape index: {}]
  %s1 = inlined_call_operand.hbm [shape: f32[8,128], index: 1, kind: input, shape index: {}]
  %s2 = inlined_call_operand.hbm [shape: f32[128,128], index: 2, kind: input, shape index: {}]
  %s3 = inlined_call_operand.hbm [shape: f32[128,128], index: 3, kind: input, shape index: {}]
  %s4 = inlined_call_operand.vmem [shape: f32[1,128], index: 4, kind: input, shape index: {}]
  %s5 = inlined_call_operand.hbm [shape: f32[128,128], index: 5, kind: input, shape index: {}]
  %s6 = inlined_call_operand.vmem [shape: f32[1,128], index: 6, kind: input, shape index: {}]
  %s7 = inlined_call_operand.hbm [shape: f32[8,128], index: 7, kind: output, shape index: {0}]
  %s8 = inlined_call_operand.hbm [shape: f32[8,128], index: 8, kind: output, shape index: {1}]
  %9 = xla_tuple %s7, %s8
  %s10 = sld [smem:[#allocation0]]
  $region66: #{vanilla_rnn_step_padded.1} parent=0
    _
  %s12 = ssub.s32 1, %s10
  %s13 = scalar_select 0, %s12, %s10
  $region1: #{vanilla_rnn_step_padded.1} parent=0
    #allocation2 [shape = 'u8[4096]{0}', space=vmem, size = 0x1000, scoped, tag = 'input window, operand 0, single buffered']
    #allocation3 [shape = 's32[1]{0}', space=sflag, size = 0x4, scoped, tag = 'scoped memory for vanilla_rnn_step_padded.1']
    #allocation4 [shape = 's32[1]{0}', space=sflag, size = 0x4, scoped, tag = 'scoped memory for vanilla_rnn_step_padded.1']
    #allocation5 [shape = 'u8[4096]{0}', space=vmem, size = 0x1000, scoped, tag = 'input window, operand 1, single buffered']
    #allocation6 [shape = 's32[1]{0}', space=sflag, size = 0x4, scoped, tag = 'scoped memory for vanilla_rnn_step_padded.1']
    #allocation7 [shape = 'u8[65536]{0}', space=vmem, size = 0x10000, scoped, tag = 'input window, operand 2, single buffered']
    #allocation8 [shape = 'u8[65536]{0}', space=vmem, size = 0x10000, scoped, tag = 'input window, operand 3, single buffered']
    #allocation9 [shape = 's32[1]{0}', space=sflag, size = 0x4, scoped, tag = 'scoped memory for vanilla_rnn_step_padded.1']
    #allocation10 [shape = 'u8[65536]{0}', space=vmem, size = 0x10000, scoped, tag = 'input window, operand 5, single buffered']
    #allocation11 [shape = 'u8[4096]{0}', space=vmem, size = 0x1000, scoped, tag = 'output window, operand 0, single buffered']
    #allocation12 [shape = 'u8[4096]{0}', space=vmem, size = 0x1000, scoped, tag = 'output window, operand 1, single buffered']
    #allocation13 [shape = 's32[1]{0}', space=sflag, size = 0x4, scoped, tag = 'scoped memory for vanilla_rnn_step_padded.1']
    %14 = vsyncpa [#allocation3], 0
    %15 = vsyncpa [#allocation6], 0
    %16 = vsyncpa [#allocation9], 0
    %17 = vsyncpa [#allocation4], 0
    %18 = vsyncpa [#allocation13], 0
    // Predicated region
    $region2: #{vanilla_rnn_step_padded.1} parent=1 // pred_check
      _
    $region3: #{vanilla_rnn_step_padded.1} parent=1 // pred_check_branch
      %20 = sbr.rel (0) target = $region5
    $region4: #{vanilla_rnn_step_padded.1} parent=1 // pred_region
      %s22 = ssub.s32 128, 128
      %23 = vsyncadd [#allocation3], %s22
      %s25 = sshll.u32 [#allocation2], 4
      %s26 = int_to_ptr.vmem [resolvable:$true] %s25
      %28 = dma.hbm_to_vmem [thread:$0]  %s0, 128, %s26, [#allocation3]
    $region5: #{vanilla_rnn_step_padded.1} parent=1 // pred_fallthru
      _
    // Predicated region
    $region6: #{vanilla_rnn_step_padded.1} parent=1 // pred_check
      _
    $region7: #{vanilla_rnn_step_padded.1} parent=1 // pred_check_branch
      %30 = sbr.rel (0) target = $region9
    $region8: #{vanilla_rnn_step_padded.1} parent=1 // pred_region
      %s32 = ssub.s32 128, 128
      %33 = vsyncadd [#allocation6], %s32
      %s35 = sshll.u32 [#allocation5], 4
      %s36 = int_to_ptr.vmem [resolvable:$true] %s35
      %38 = dma.hbm_to_vmem [thread:$0]  %s1, 128, %s36, [#allocation6]
    $region9: #{vanilla_rnn_step_padded.1} parent=1 // pred_fallthru
      _
    // Predicated region
    $region10: #{vanilla_rnn_step_padded.1} parent=1 // pred_check
      _
    $region11: #{vanilla_rnn_step_padded.1} parent=1 // pred_check_branch
      %40 = sbr.rel (0) target = $region13
    $region12: #{vanilla_rnn_step_padded.1} parent=1 // pred_region
      %s42 = ssub.s32 2048, 2048
      %43 = vsyncadd [#allocation6], %s42
      %s44 = sshll.u32 [#allocation7], 4
      %s45 = int_to_ptr.vmem [resolvable:$true] %s44
      %50 = dma.hbm_to_vmem [thread:$0]  %s2, 2048, %s45, [#allocation6], 128, 128, 8
    $region13: #{vanilla_rnn_step_padded.1} parent=1 // pred_fallthru
      _
    // Predicated region
    $region14: #{vanilla_rnn_step_padded.1} parent=1 // pred_check
      _
    $region15: #{vanilla_rnn_step_padded.1} parent=1 // pred_check_branch
      %52 = sbr.rel (0) target = $region17
    $region16: #{vanilla_rnn_step_padded.1} parent=1 // pred_region
      %s54 = ssub.s32 2048, 2048
      %55 = vsyncadd [#allocation9], %s54
      %s56 = sshll.u32 [#allocation8], 4
      %s57 = int_to_ptr.vmem [resolvable:$true] %s56
      %62 = dma.hbm_to_vmem [thread:$0]  %s3, 2048, %s57, [#allocation9], 128, 128, 8
    $region17: #{vanilla_rnn_step_padded.1} parent=1 // pred_fallthru
      _
    // Predicated region
    $region18: #{vanilla_rnn_step_padded.1} parent=1 // pred_check
      _
    $region19: #{vanilla_rnn_step_padded.1} parent=1 // pred_check_branch
      %64 = sbr.rel (0) target = $region21
    $region20: #{vanilla_rnn_step_padded.1} parent=1 // pred_region
      _
    $region21: #{vanilla_rnn_step_padded.1} parent=1 // pred_fallthru
      _
    // Predicated region
    $region22: #{vanilla_rnn_step_padded.1} parent=1 // pred_check
      _
    $region23: #{vanilla_rnn_step_padded.1} parent=1 // pred_check_branch
      %66 = sbr.rel (0) target = $region25
    $region24: #{vanilla_rnn_step_padded.1} parent=1 // pred_region
      %s68 = ssub.s32 2048, 2048
      %69 = vsyncadd [#allocation9], %s68
      %s70 = sshll.u32 [#allocation10], 4
      %s71 = int_to_ptr.vmem [resolvable:$true] %s70
      %76 = dma.hbm_to_vmem [thread:$0]  %s5, 2048, %s71, [#allocation9], 128, 128, 8
    $region25: #{vanilla_rnn_step_padded.1} parent=1 // pred_fallthru
      _
    // Predicated region
    $region26: #{vanilla_rnn_step_padded.1} parent=1 // pred_check
      _
    $region27: #{vanilla_rnn_step_padded.1} parent=1 // pred_check_branch
      %78 = sbr.rel (0) target = $region29
    $region28: #{vanilla_rnn_step_padded.1} parent=1 // pred_region
      _
    $region29: #{vanilla_rnn_step_padded.1} parent=1 // pred_fallthru
      _
    // Predicated region
    $region30: #{vanilla_rnn_step_padded.1} parent=1 // pred_check
      _
    $region31: #{vanilla_rnn_step_padded.1} parent=1 // pred_check_branch
      %80 = sbr.rel (0) target = $region33
    $region32: #{vanilla_rnn_step_padded.1} parent=1 // pred_region
      %81 = dma.done [#allocation3], 128
    $region33: #{vanilla_rnn_step_padded.1} parent=1 // pred_fallthru
      _
    // Predicated region
    $region34: #{vanilla_rnn_step_padded.1} parent=1 // pred_check
      _
    $region35: #{vanilla_rnn_step_padded.1} parent=1 // pred_check_branch
      %83 = sbr.rel (0) target = $region37
    $region36: #{vanilla_rnn_step_padded.1} parent=1 // pred_region
      %84 = dma.done [#allocation6], 128
    $region37: #{vanilla_rnn_step_padded.1} parent=1 // pred_fallthru
      _
    // Predicated region
    $region38: #{vanilla_rnn_step_padded.1} parent=1 // pred_check
      _
    $region39: #{vanilla_rnn_step_padded.1} parent=1 // pred_check_branch
      %86 = sbr.rel (0) target = $region41
    $region40: #{vanilla_rnn_step_padded.1} parent=1 // pred_region
      %87 = dma.done [#allocation6], 2048
    $region41: #{vanilla_rnn_step_padded.1} parent=1 // pred_fallthru
      _
    // Predicated region
    $region42: #{vanilla_rnn_step_padded.1} parent=1 // pred_check
      _
    $region43: #{vanilla_rnn_step_padded.1} parent=1 // pred_check_branch
      %89 = sbr.rel (0) target = $region45
    $region44: #{vanilla_rnn_step_padded.1} parent=1 // pred_region
      %90 = dma.done [#allocation9], 2048
    $region45: #{vanilla_rnn_step_padded.1} parent=1 // pred_fallthru
      _
    // Predicated region
    $region46: #{vanilla_rnn_step_padded.1} parent=1 // pred_check
      _
    $region47: #{vanilla_rnn_step_padded.1} parent=1 // pred_check_branch
      %92 = sbr.rel (0) target = $region49
    $region48: #{vanilla_rnn_step_padded.1} parent=1 // pred_region
      %93 = dma.done [#allocation9], 2048
    $region49: #{vanilla_rnn_step_padded.1} parent=1 // pred_fallthru
      _
    %v94 = vld [vmem:[#allocation2] sm:$0xff]
    %v95 = vld [vmem:[#allocation7] sm:$0xff]
    %v96 = vld [vmem:[#allocation7 + $0x8] sm:$0xff]
    %v97 = vld [vmem:[#allocation7 + $0x10] sm:$0xff]
    %v98 = vld [vmem:[#allocation7 + $0x18] sm:$0xff]
    %v99 = vld [vmem:[#allocation7 + $0x20] sm:$0xff]
    %v100 = vld [vmem:[#allocation7 + $0x28] sm:$0xff]
    %v101 = vld [vmem:[#allocation7 + $0x30] sm:$0xff]
    %v102 = vld [vmem:[#allocation7 + $0x38] sm:$0xff]
    %v103 = vld [vmem:[#allocation7 + $0x40] sm:$0xff]
    %v104 = vld [vmem:[#allocation7 + $0x48] sm:$0xff]
    %v105 = vld [vmem:[#allocation7 + $0x50] sm:$0xff]
    %v106 = vld [vmem:[#allocation7 + $0x58] sm:$0xff]
    %v107 = vld [vmem:[#allocation7 + $0x60] sm:$0xff]
    %v108 = vld [vmem:[#allocation7 + $0x68] sm:$0xff]
    %v109 = vld [vmem:[#allocation7 + $0x70] sm:$0xff]
    %v110 = vld [vmem:[#allocation7 + $0x78] sm:$0xff]
    %v111 = vld [vmem:[#allocation5] sm:$0xff]
    %v112 = vld [vmem:[#allocation8] sm:$0xff]
    %v113 = vld [vmem:[#allocation8 + $0x8] sm:$0xff]
    %v114 = vld [vmem:[#allocation8 + $0x10] sm:$0xff]
    %v115 = vld [vmem:[#allocation8 + $0x18] sm:$0xff]
    %v116 = vld [vmem:[#allocation8 + $0x20] sm:$0xff]
    %v117 = vld [vmem:[#allocation8 + $0x28] sm:$0xff]
    %v118 = vld [vmem:[#allocation8 + $0x30] sm:$0xff]
    %v119 = vld [vmem:[#allocation8 + $0x38] sm:$0xff]
    %v120 = vld [vmem:[#allocation8 + $0x40] sm:$0xff]
    %v121 = vld [vmem:[#allocation8 + $0x48] sm:$0xff]
    %v122 = vld [vmem:[#allocation8 + $0x50] sm:$0xff]
    %v123 = vld [vmem:[#allocation8 + $0x58] sm:$0xff]
    %v124 = vld [vmem:[#allocation8 + $0x60] sm:$0xff]
    %v125 = vld [vmem:[#allocation8 + $0x68] sm:$0xff]
    %v126 = vld [vmem:[#allocation8 + $0x70] sm:$0xff]
    %v127 = vld [vmem:[#allocation8 + $0x78] sm:$0xff]
    %128 = vmatprep.subr.mxu0 0.0
    %129 = vmatpush1.msra.mxu0 %v112
    %130 = vmatprep.subr.mxu0 0.0
    %131 = vmatpush1.msra.mxu0 %v113
    %132 = vmatprep.subr.mxu0 0.0
    %133 = vmatpush1.msra.mxu0 %v114
    %134 = vmatprep.subr.mxu0 0.0
    %135 = vmatpush1.msra.mxu0 %v115
    %136 = vmatprep.subr.mxu0 0.0
    %137 = vmatpush1.msra.mxu0 %v116
    %138 = vmatprep.subr.mxu0 0.0
    %139 = vmatpush1.msra.mxu0 %v117
    %140 = vmatprep.subr.mxu0 0.0
    %141 = vmatpush1.msra.mxu0 %v118
    %142 = vmatprep.subr.mxu0 0.0
    %143 = vmatpush1.msra.mxu0 %v119
    %144 = vmatprep.subr.mxu0 0.0
    %145 = vmatpush1.msra.mxu0 %v120
    %146 = vmatprep.subr.mxu0 0.0
    %147 = vmatpush1.msra.mxu0 %v121
    %148 = vmatprep.subr.mxu0 0.0
    %149 = vmatpush1.msra.mxu0 %v122
    %150 = vmatprep.subr.mxu0 0.0
    %151 = vmatpush1.msra.mxu0 %v123
    %152 = vmatprep.subr.mxu0 0.0
    %153 = vmatpush1.msra.mxu0 %v124
    %154 = vmatprep.subr.mxu0 0.0
    %155 = vmatpush1.msra.mxu0 %v125
    %156 = vmatprep.subr.mxu0 0.0
    %157 = vmatpush1.msra.mxu0 %v126
    %158 = vmatprep.subr.mxu0 0.0
    %159 = vmatpush1.msra.mxu0 %v127
    %160 = vmatprep.subr.mxu0 0.0
    %161 = vmatpush1.msra.mxu0 0.0
    %162 = vmatprep.subr.mxu0 0.0
    %163 = vmatpush1.msra.mxu0 0.0
    %164 = vmatprep.subr.mxu0 0.0
    %165 = vmatpush1.msra.mxu0 0.0
    %166 = vmatprep.subr.mxu0 0.0
    %167 = vmatpush1.msra.mxu0 0.0
    %168 = vmatprep.subr.mxu0 0.0
    %169 = vmatpush1.msra.mxu0 0.0
    %170 = vmatprep.subr.mxu0 0.0
    %171 = vmatpush1.msra.mxu0 0.0
    %172 = vmatprep.subr.mxu0 0.0
    %173 = vmatpush1.msra.mxu0 0.0
    %174 = vmatprep.subr.mxu0 0.0
    %175 = vmatpush1.msra.mxu0 0.0
    %176 = vmatprep.subr.mxu0 0.0
    %177 = vmatpush1.msra.mxu0 0.0
    %178 = vmatprep.subr.mxu0 0.0
    %179 = vmatpush1.msra.mxu0 0.0
    %180 = vmatprep.subr.mxu0 0.0
    %181 = vmatpush1.msra.mxu0 0.0
    %182 = vmatprep.subr.mxu0 0.0
    %183 = vmatpush1.msra.mxu0 0.0
    %184 = vmatprep.subr.mxu0 0.0
    %185 = vmatpush1.msra.mxu0 0.0
    %186 = vmatprep.subr.mxu0 0.0
    %187 = vmatpush1.msra.mxu0 0.0
    %188 = vmatprep.subr.mxu0 0.0
    %189 = vmatpush1.msra.mxu0 0.0
    %190 = vmatprep.subr.mxu0 0.0
    %191 = vmatpush1.msra.mxu0 0.0
    %192 = vmatprep.mubr.f32.mxu0 0.0
    %193 = vmatmul.mubr.f32.gmra.mrb[0].mxu0 %v111
    %v194 = vpop.f32.mrb[0].mxu0
    %v195 = vadd.f32 0.0, %v194
    %v196 = vpop.f32.mrb[0].mxu0
    %197 = vdwg.mxu0
    %198 = vmatprep.subr.mxu0 0.0
    %199 = vmatpush1.msra.mxu0 %v95
    %200 = vmatprep.subr.mxu0 0.0
    %201 = vmatpush1.msra.mxu0 %v96
    %202 = vmatprep.subr.mxu0 0.0
    %203 = vmatpush1.msra.mxu0 %v97
    %204 = vmatprep.subr.mxu0 0.0
    %205 = vmatpush1.msra.mxu0 %v98
    %206 = vmatprep.subr.mxu0 0.0
    %207 = vmatpush1.msra.mxu0 %v99
    %208 = vmatprep.subr.mxu0 0.0
    %209 = vmatpush1.msra.mxu0 %v100
    %210 = vmatprep.subr.mxu0 0.0
    %211 = vmatpush1.msra.mxu0 %v101
    %212 = vmatprep.subr.mxu0 0.0
    %213 = vmatpush1.msra.mxu0 %v102
    %214 = vmatprep.subr.mxu0 0.0
    %215 = vmatpush1.msra.mxu0 %v103
    %216 = vmatprep.subr.mxu0 0.0
    %217 = vmatpush1.msra.mxu0 %v104
    %218 = vmatprep.subr.mxu0 0.0
    %219 = vmatpush1.msra.mxu0 %v105
    %220 = vmatprep.subr.mxu0 0.0
    %221 = vmatpush1.msra.mxu0 %v106
    %222 = vmatprep.subr.mxu0 0.0
    %223 = vmatpush1.msra.mxu0 %v107
    %224 = vmatprep.subr.mxu0 0.0
    %225 = vmatpush1.msra.mxu0 %v108
    %226 = vmatprep.subr.mxu0 0.0
    %227 = vmatpush1.msra.mxu0 %v109
    %228 = vmatprep.subr.mxu0 0.0
    %229 = vmatpush1.msra.mxu0 %v110
    %230 = vmatprep.subr.mxu0 0.0
    %231 = vmatpush1.msra.mxu0 0.0
    %232 = vmatprep.subr.mxu0 0.0
    %233 = vmatpush1.msra.mxu0 0.0
    %234 = vmatprep.subr.mxu0 0.0
    %235 = vmatpush1.msra.mxu0 0.0
    %236 = vmatprep.subr.mxu0 0.0
    %237 = vmatpush1.msra.mxu0 0.0
    %238 = vmatprep.subr.mxu0 0.0
    %239 = vmatpush1.msra.mxu0 0.0
    %240 = vmatprep.subr.mxu0 0.0
    %241 = vmatpush1.msra.mxu0 0.0
    %242 = vmatprep.subr.mxu0 0.0
    %243 = vmatpush1.msra.mxu0 0.0
    %244 = vmatprep.subr.mxu0 0.0
    %245 = vmatpush1.msra.mxu0 0.0
    %246 = vmatprep.subr.mxu0 0.0
    %247 = vmatpush1.msra.mxu0 0.0
    %248 = vmatprep.subr.mxu0 0.0
    %249 = vmatpush1.msra.mxu0 0.0
    %250 = vmatprep.subr.mxu0 0.0
    %251 = vmatpush1.msra.mxu0 0.0
    %252 = vmatprep.subr.mxu0 0.0
    %253 = vmatpush1.msra.mxu0 0.0
    %254 = vmatprep.subr.mxu0 0.0
    %255 = vmatpush1.msra.mxu0 0.0
    %256 = vmatprep.subr.mxu0 0.0
    %257 = vmatpush1.msra.mxu0 0.0
    %258 = vmatprep.subr.mxu0 0.0
    %259 = vmatpush1.msra.mxu0 0.0
    %260 = vmatprep.subr.mxu0 0.0
    %261 = vmatpush1.msra.mxu0 0.0
    %262 = vmatprep.mubr.f32.mxu0 0.0
    %263 = vmatmul.mubr.f32.gmra.mrb[0].mxu0 %v94
    %v264 = vpop.f32.mrb[0].mxu0
    %v265 = vadd.f32 %v195, %v264
    %v266 = vpop.f32.mrb[0].mxu0
    %267 = vdwg.mxu0
    %v268 = vld [vmem:[%s4] sm:$0x1]
    %v270 = vlaneseq
    %v271 = vshrl.u32 %v270, 7
    %v272 = vsub.s32 0, %v271
    %v273 = vrot.slane %v268, %v272
    %v275 = vadd.f32 %v265, %v273
    %v276 = vmax.f32 %v275, 0.0
    %v277 = vld [vmem:[#allocation10] sm:$0xff]
    %v278 = vld [vmem:[#allocation10 + $0x8] sm:$0xff]
    %v279 = vld [vmem:[#allocation10 + $0x10] sm:$0xff]
    %v280 = vld [vmem:[#allocation10 + $0x18] sm:$0xff]
    %v281 = vld [vmem:[#allocation10 + $0x20] sm:$0xff]
    %v282 = vld [vmem:[#allocation10 + $0x28] sm:$0xff]
    %v283 = vld [vmem:[#allocation10 + $0x30] sm:$0xff]
    %v284 = vld [vmem:[#allocation10 + $0x38] sm:$0xff]
    %v285 = vld [vmem:[#allocation10 + $0x40] sm:$0xff]
    %v286 = vld [vmem:[#allocation10 + $0x48] sm:$0xff]
    %v287 = vld [vmem:[#allocation10 + $0x50] sm:$0xff]
    %v288 = vld [vmem:[#allocation10 + $0x58] sm:$0xff]
    %v289 = vld [vmem:[#allocation10 + $0x60] sm:$0xff]
    %v290 = vld [vmem:[#allocation10 + $0x68] sm:$0xff]
    %v291 = vld [vmem:[#allocation10 + $0x70] sm:$0xff]
    %v292 = vld [vmem:[#allocation10 + $0x78] sm:$0xff]
    %v293 = vld [vmem:[%s6] sm:$0x1]
    %v295 = vlaneseq
    %v296 = vshrl.u32 %v295, 7
    %v297 = vsub.s32 0, %v296
    %v298 = vrot.slane %v293, %v297
    %300 = vmatprep.subr.mxu0 0.0
    %301 = vmatpush1.msra.mxu0 %v277
    %302 = vmatprep.subr.mxu0 0.0
    %303 = vmatpush1.msra.mxu0 %v278
    %304 = vmatprep.subr.mxu0 0.0
    %305 = vmatpush1.msra.mxu0 %v279
    %306 = vmatprep.subr.mxu0 0.0
    %307 = vmatpush1.msra.mxu0 %v280
    %308 = vmatprep.subr.mxu0 0.0
    %309 = vmatpush1.msra.mxu0 %v281
    %310 = vmatprep.subr.mxu0 0.0
    %311 = vmatpush1.msra.mxu0 %v282
    %312 = vmatprep.subr.mxu0 0.0
    %313 = vmatpush1.msra.mxu0 %v283
    %314 = vmatprep.subr.mxu0 0.0
    %315 = vmatpush1.msra.mxu0 %v284
    %316 = vmatprep.subr.mxu0 0.0
    %317 = vmatpush1.msra.mxu0 %v285
    %318 = vmatprep.subr.mxu0 0.0
    %319 = vmatpush1.msra.mxu0 %v286
    %320 = vmatprep.subr.mxu0 0.0
    %321 = vmatpush1.msra.mxu0 %v287
    %322 = vmatprep.subr.mxu0 0.0
    %323 = vmatpush1.msra.mxu0 %v288
    %324 = vmatprep.subr.mxu0 0.0
    %325 = vmatpush1.msra.mxu0 %v289
    %326 = vmatprep.subr.mxu0 0.0
    %327 = vmatpush1.msra.mxu0 %v290
    %328 = vmatprep.subr.mxu0 0.0
    %329 = vmatpush1.msra.mxu0 %v291
    %330 = vmatprep.subr.mxu0 0.0
    %331 = vmatpush1.msra.mxu0 %v292
    %332 = vmatprep.subr.mxu0 0.0
    %333 = vmatpush1.msra.mxu0 0.0
    %334 = vmatprep.subr.mxu0 0.0
    %335 = vmatpush1.msra.mxu0 0.0
    %336 = vmatprep.subr.mxu0 0.0
    %337 = vmatpush1.msra.mxu0 0.0
    %338 = vmatprep.subr.mxu0 0.0
    %339 = vmatpush1.msra.mxu0 0.0
    %340 = vmatprep.subr.mxu0 0.0
    %341 = vmatpush1.msra.mxu0 0.0
    %342 = vmatprep.subr.mxu0 0.0
    %343 = vmatpush1.msra.mxu0 0.0
    %344 = vmatprep.subr.mxu0 0.0
    %345 = vmatpush1.msra.mxu0 0.0
    %346 = vmatprep.subr.mxu0 0.0
    %347 = vmatpush1.msra.mxu0 0.0
    %348 = vmatprep.subr.mxu0 0.0
    %349 = vmatpush1.msra.mxu0 0.0
    %350 = vmatprep.subr.mxu0 0.0
    %351 = vmatpush1.msra.mxu0 0.0
    %352 = vmatprep.subr.mxu0 0.0
    %353 = vmatpush1.msra.mxu0 0.0
    %354 = vmatprep.subr.mxu0 0.0
    %355 = vmatpush1.msra.mxu0 0.0
    %356 = vmatprep.subr.mxu0 0.0
    %357 = vmatpush1.msra.mxu0 0.0
    %358 = vmatprep.subr.mxu0 0.0
    %359 = vmatpush1.msra.mxu0 0.0
    %360 = vmatprep.subr.mxu0 0.0
    %361 = vmatpush1.msra.mxu0 0.0
    %362 = vmatprep.subr.mxu0 0.0
    %363 = vmatpush1.msra.mxu0 0.0
    %364 = vmatprep.mubr.f32.mxu0 0.0
    %365 = vmatmul.mubr.f32.gmra.mrb[0].mxu0 %v276
    %v366 = vpop.f32.mrb[0].mxu0
    %v367 = vadd.f32 %v298, %v366
    %v368 = vpop.f32.mrb[0].mxu0
    %369 = vdwg.mxu0
    %v370 = vmax.f32 %v367, 0.0
    %371 = vst [vmem:[#allocation11] sm:$0xff] %v370
    %372 = vst [vmem:[#allocation12] sm:$0xff] %v276
    // Predicated region
    $region50: #{vanilla_rnn_step_padded.1} parent=1 // pred_check
      _
    $region51: #{vanilla_rnn_step_padded.1} parent=1 // pred_check_branch
      %374 = sbr.rel (0) target = $region53
    $region52: #{vanilla_rnn_step_padded.1} parent=1 // pred_region
      %s376 = ssub.s32 128, 128
      %377 = vsyncadd [#allocation4], %s376
      %s379 = sshll.u32 [#allocation11], 4
      %s380 = int_to_ptr.vmem [resolvable:$true] %s379
      %382 = dma.vmem_to_hbm [thread:$0]  %s380, 128, %s7, [#allocation4]
    $region53: #{vanilla_rnn_step_padded.1} parent=1 // pred_fallthru
      _
    // Predicated region
    $region54: #{vanilla_rnn_step_padded.1} parent=1 // pred_check
      _
    $region55: #{vanilla_rnn_step_padded.1} parent=1 // pred_check_branch
      %384 = sbr.rel (0) target = $region57
    $region56: #{vanilla_rnn_step_padded.1} parent=1 // pred_region
      %s386 = ssub.s32 128, 128
      %387 = vsyncadd [#allocation13], %s386
      %s389 = sshll.u32 [#allocation12], 4
      %s390 = int_to_ptr.vmem [resolvable:$true] %s389
      %392 = dma.vmem_to_hbm [thread:$0]  %s390, 128, %s8, [#allocation13]
    $region57: #{vanilla_rnn_step_padded.1} parent=1 // pred_fallthru
      _
    // Predicated region
    $region58: #{vanilla_rnn_step_padded.1} parent=1 // pred_check
      _
    $region59: #{vanilla_rnn_step_padded.1} parent=1 // pred_check_branch
      %394 = sbr.rel (0) target = $region61
    $region60: #{vanilla_rnn_step_padded.1} parent=1 // pred_region
      %395 = dma.done [#allocation4], 128
    $region61: #{vanilla_rnn_step_padded.1} parent=1 // pred_fallthru
      _
    // Predicated region
    $region62: #{vanilla_rnn_step_padded.1} parent=1 // pred_check
      _
    $region63: #{vanilla_rnn_step_padded.1} parent=1 // pred_check_branch
      %397 = sbr.rel (0) target = $region65
    $region64: #{vanilla_rnn_step_padded.1} parent=1 // pred_region
      %398 = dma.done [#allocation13], 128
    $region65: #{vanilla_rnn_step_padded.1} parent=1 // pred_fallthru
      _
    %399 = vsyncpa [#allocation3], 1
    %400 = vsyncpa [#allocation6], 1
    %401 = vsyncpa [#allocation9], 1
    %402 = vsyncpa [#allocation4], 1
    %403 = vsyncpa [#allocation13], 1

</llo_original>
